<compile_context>
chip_gen: v7x
topology: tpu7x:2x2x1
jax: 0.10.0
libtpu: 0.0.40
codegen_flags: <defaults>
</compile_context>

<pallas_src>
import functools

import jax
import jax.numpy as jnp
from jax.experimental import pallas as pl
from jax.experimental.pallas import tpu as pltpu


_LANES = 128
_SUBLANES = 8
# Target bytes for one prediction (f32) input block.  With double buffering and
# the (narrower) `true` stream this keeps total VMEM use well inside every
# generation's scoped-VMEM budget (v5e 16 MiB default, v6e/v7x 32 MiB).
_TARGET_BLOCK_BYTES = 3 * 1024 * 1024


def _round_up(x, m):
    return ((x + m - 1) // m) * m


def _hybrid_sums_kernel(p_ref, t_ref, out_ref, *, power, tile_rows):
    """Accumulate lane-wise partial sums of the four reduction quantities.

    p_ref, t_ref : (B, tile_rows, 128) blocks of prediction / target.
    out_ref      : (1, B, 32, 128) resident accumulator:
                     rows  0: 8  -> sum(p * t)
                     rows  8:16  -> sum(p)
                     rows 16:24  -> sum(t)
                     rows 24:32  -> sum(t * (1 - p)^power * log(p))   (alpha hoisted)
    """
    k = pl.program_id(1)

    @pl.when(k == 0)
    def _():
        out_ref[...] = jnp.zeros_like(out_ref)

    # clamp only the prediction (matches torch .clamp(min=1e-5, max=1.0))
    p = jnp.clip(p_ref[...].astype(jnp.float32), 1e-5, 1.0)
    t = t_ref[...].astype(jnp.float32)

    b = p.shape[0]
    p4 = p.reshape(b, tile_rows // _SUBLANES, _SUBLANES, _LANES)
    t4 = t.reshape(b, tile_rows // _SUBLANES, _SUBLANES, _LANES)

    # Reduce only over the vreg-group axis (pure VPU adds); lane / sublane
    # reductions are deferred to the JAX epilogue.
    s_pt = jnp.sum(p4 * t4, axis=1)                                 # (B, 8, 128)
    s_p = jnp.sum(p4, axis=1)
    s_t = jnp.sum(t4, axis=1)
    s_f = jnp.sum(t4 * (1.0 - p4) ** power * jnp.log(p4), axis=1)

    # One combined, fully 8x128-aligned (unmasked) accumulator update per step.
    out_ref[...] += jnp.concatenate([s_pt, s_p, s_t, s_f], axis=1)[None]


def hybrid_loss(prediction, true, *, lambda_a=0.5, classes=23,
                alpha=0.25, power=2):
    """prediction, true: (B, C, W, H, D) arrays -> scalar HybridLoss."""
    b, c, w, h, d = prediction.shape
    n = c * w * h * d

    # ---- choose a lane-dense tiling -------------------------------------
    rows_raw = -(-n // _LANES)                        # ceil(n / 128)
    bytes_per_row = b * _LANES * 4                    # one f32 prediction row
    target_rows = max(
        _SUBLANES,
        (_TARGET_BLOCK_BYTES // bytes_per_row) // _SUBLANES * _SUBLANES)

    if rows_raw <= target_rows:
        num_shards, tile_rows, steps = 1, _round_up(rows_raw, _SUBLANES), 1
    else:
        # Only shard when each shard gets at least one full tile; on v7x the
        # two shards map onto the two TensorCores via the "parallel" axis.
        num_shards = 2 if rows_raw >= 2 * target_rows else 1
        tile_rows = target_rows
        steps = _round_up(rows_raw, num_shards * tile_rows) // (num_shards * tile_rows)
    rows = num_shards * steps * tile_rows
    pad = rows * _LANES - n

    # ---- lane-dense layout; pad with (p=1, t=0), exactly correctable ----
    p2 = prediction.reshape(b, n)
    t2 = true.reshape(b, n)
    if pad:
        p2 = jnp.pad(p2, ((0, 0), (0, pad)), constant_values=1.0)
        t2 = jnp.pad(t2, ((0, 0), (0, pad)), constant_values=0.0)
    p3 = p2.reshape(b, rows, _LANES)
    t3 = t2.reshape(b, rows, _LANES)

    kernel = functools.partial(_hybrid_sums_kernel,
                               power=int(power), tile_rows=tile_rows)

    partials = pl.pallas_call(
        kernel,
        out_shape=jax.ShapeDtypeStruct(
            (num_shards, b, 4 * _SUBLANES, _LANES), jnp.float32),
        grid_spec=pltpu.PrefetchScalarGridSpec(
            num_scalar_prefetch=0,
            grid=(num_shards, steps),
            in_specs=[
                pl.BlockSpec((b, tile_rows, _LANES),
                             lambda s, k: (0, s * steps + k, 0)),
                pl.BlockSpec((b, tile_rows, _LANES),
                             lambda s, k: (0, s * steps + k, 0)),
            ],
            out_specs=pl.BlockSpec((1, b, 4 * _SUBLANES, _LANES),
                                   lambda s, k: (s, 0, 0, 0)),
        ),
        compiler_params=pltpu.CompilerParams(
            dimension_semantics=("parallel", "arbitrary"),
            vmem_limit_bytes=32 * 1024 * 1024),
    )(p3, t3)

    # ---- epilogue: tiny cross-shard / sublane / lane reduce in plain JAX ----
    sums = partials.reshape(num_shards, b, 4, _SUBLANES, _LANES).sum(axis=(0, 3, 4))
    s_pt, s_p, s_t, s_f = sums[:, 0], sums[:, 1], sums[:, 2], sums[:, 3]
    s_p = s_p - pad                                      # remove pad contribution

    coff = 2.0 * s_pt / (s_p + s_t)
    loss1 = 1.0 - jnp.mean(coff)                         # DiceLoss
    loss2 = -jnp.mean(alpha * s_f / float(w * h * d))    # FocalLoss
    return (loss1 + lambda_a * loss2) * classes


def _ref_hybrid_loss(prediction, true, lambda_a=0.5, classes=23,
                     alpha=0.25, power=2):
    b, c, w, h, d = prediction.shape
    p = jnp.clip(prediction.astype(jnp.float32), 1e-5, 1.0).reshape(b, -1)
    t = true.astype(jnp.float32).reshape(b, -1)
    coff = 2.0 * (p * t).sum(1) / (p.sum(1) + t.sum(1))
    loss1 = 1.0 - coff.mean()
    fl = alpha * t * (1.0 - p) ** power * jnp.log(p)
    loss2 = -(fl.sum(1) / (w * h * d)).mean()
    return (loss1 + lambda_a * loss2) * classes


if __name__ == "__main__":
    key = jax.random.PRNGKey(0)
    kp, kt = jax.random.split(key)

    # small 5-D shapes consistent with FocalLoss's (b, c, w, h, d) unpacking
    B, C, W, H, D = 2, 4, 8, 8, 4
    prediction = jax.random.uniform(kp, (B, C, W, H, D), dtype=jnp.float32)
    # `true` is a 0/1 mask -> bf16 is exact for it and cuts HBM traffic ~25%.
    true = (jax.random.uniform(kt, (B, C, W, H, D)) > 0.5).astype(jnp.bfloat16)

    loss = jax.block_until_ready(hybrid_loss(prediction, true))
    ref = _ref_hybrid_loss(prediction, true)

    assert jnp.allclose(loss, ref, rtol=1e-5, atol=1e-5), (loss, ref)
    print("KERNEL_OK")
</pallas_src>

<mosaic_0001>
module attributes {stable_mosaic.version = 11 : i64} {
  func.func @_hybrid_sums_kernel(%arg0: i32, %arg1: i32, %arg2: memref<2x8x128xf32, #tpu.memory_space<vmem>>, %arg3: memref<2x8x128xbf16, #tpu.memory_space<vmem>>, %arg4: memref<1x2x32x128xf32, #tpu.memory_space<vmem>>) attributes {dimension_semantics = [#tpu.dimension_semantics<parallel>, #tpu.dimension_semantics<arbitrary>], iteration_bounds = array<i64: 1, 1>, scalar_prefetch = 0 : i64, scratch_operands = 0 : i64, tpu.core_type = #tpu.core_type<tc>, window_params = [{transform_indices = @transform_0, window_bounds = array<i64: 2, 8, 128>}, {transform_indices = @transform_1, window_bounds = array<i64: 2, 8, 128>}, {transform_indices = @transform_2, window_bounds = array<i64: 1, 2, 32, 128>}]} {
    %c0_i32 = arith.constant 0 : i32
    %0 = arith.cmpi eq, %arg1, %c0_i32 : i32
    %1 = arith.extui %0 : i1 to i32
    %c0_i32_0 = arith.constant 0 : i32
    %2 = arith.cmpi ne, %1, %c0_i32_0 : i32
    scf.if %2 {
      %cst_20 = arith.constant 0.000000e+00 : f32
      %28 = vector.broadcast %cst_20 : f32 to vector<1x2x32x128xf32>
      %c0_21 = arith.constant 0 : index
      %c0_22 = arith.constant 0 : index
      %c0_23 = arith.constant 0 : index
      %c0_24 = arith.constant 0 : index
      %29 = vector.load %arg4[%c0_21, %c0_22, %c0_23, %c0_24] : memref<1x2x32x128xf32, #tpu.memory_space<vmem>>, vector<1x2x32x128xf32>
      tpu.vector_store %arg4[%c0_21, %c0_22, %c0_23, %c0_24], %28 {strides = array<i32>} : memref<1x2x32x128xf32, #tpu.memory_space<vmem>>, vector<1x2x32x128xf32>,
    } else {
    }
    %c0 = arith.constant 0 : index
    %c0_1 = arith.constant 0 : index
    %c0_2 = arith.constant 0 : index
    %3 = vector.load %arg2[%c0, %c0_1, %c0_2] : memref<2x8x128xf32, #tpu.memory_space<vmem>>, vector<2x8x128xf32>
    %cst = arith.constant 9.99999974E-6 : f32
    %cst_3 = arith.constant 1.000000e+00 : f32
    %4 = vector.broadcast %cst : f32 to vector<2x8x128xf32>
    %5 = arith.maximumf %4, %3 : vector<2x8x128xf32>
    %6 = vector.broadcast %cst_3 : f32 to vector<2x8x128xf32>
    %7 = arith.minimumf %6, %5 : vector<2x8x128xf32>
    %c0_4 = arith.constant 0 : index
    %c0_5 = arith.constant 0 : index
    %c0_6 = arith.constant 0 : index
    %8 = vector.load %arg3[%c0_4, %c0_5, %c0_6] : memref<2x8x128xbf16, #tpu.memory_space<vmem>>, vector<2x8x128xbf16>
    %9 = arith.extf %8 : vector<2x8x128xbf16> to vector<2x8x128xf32>
    %10 = vector.shape_cast %7 : vector<2x8x128xf32> to vector<2x1x8x128xf32>
    %11 = vector.shape_cast %9 : vector<2x8x128xf32> to vector<2x1x8x128xf32>
    %12 = arith.mulf %10, %11 : vector<2x1x8x128xf32>
    %cst_7 = arith.constant dense<0.000000e+00> : vector<2x8x128xf32>
    %13 = vector.multi_reduction <add>, %12, %cst_7 [1] : vector<2x1x8x128xf32> to vector<2x8x128xf32>
    %cst_8 = arith.constant dense<0.000000e+00> : vector<2x8x128xf32>
    %14 = vector.multi_reduction <add>, %10, %cst_8 [1] : vector<2x1x8x128xf32> to vector<2x8x128xf32>
    %cst_9 = arith.constant dense<0.000000e+00> : vector<2x8x128xf32>
    %15 = vector.multi_reduction <add>, %11, %cst_9 [1] : vector<2x1x8x128xf32> to vector<2x8x128xf32>
    %cst_10 = arith.constant 1.000000e+00 : f32
    %16 = vector.broadcast %cst_10 : f32 to vector<2x1x8x128xf32>
    %17 = arith.subf %16, %10 : vector<2x1x8x128xf32>
    %18 = arith.mulf %17, %17 : vector<2x1x8x128xf32>
    %19 = arith.mulf %11, %18 : vector<2x1x8x128xf32>
    %20 = math.log %10 : vector<2x1x8x128xf32>
    %21 = arith.mulf %19, %20 : vector<2x1x8x128xf32>
    %cst_11 = arith.constant dense<0.000000e+00> : vector<2x8x128xf32>
    %22 = vector.multi_reduction <add>, %21, %cst_11 [1] : vector<2x1x8x128xf32> to vector<2x8x128xf32>
    %c0_12 = arith.constant 0 : index
    %c0_13 = arith.constant 0 : index
    %c0_14 = arith.constant 0 : index
    %c0_15 = arith.constant 0 : index
    %23 = vector.load %arg4[%c0_12, %c0_13, %c0_14, %c0_15] : memref<1x2x32x128xf32, #tpu.memory_space<vmem>>, vector<1x2x32x128xf32>
    %24 = tpu.concatenate %13, %14, %15, %22 in 1 : vector<2x8x128xf32>, vector<2x8x128xf32>, vector<2x8x128xf32>, vector<2x8x128xf32> -> vector<2x32x128xf32>
    %25 = vector.shape_cast %24 : vector<2x32x128xf32> to vector<1x2x32x128xf32>
    %26 = arith.addf %23, %25 : vector<1x2x32x128xf32>
    %c0_16 = arith.constant 0 : index
    %c0_17 = arith.constant 0 : index
    %c0_18 = arith.constant 0 : index
    %c0_19 = arith.constant 0 : index
    %27 = vector.load %arg4[%c0_16, %c0_17, %c0_18, %c0_19] : memref<1x2x32x128xf32, #tpu.memory_space<vmem>>, vector<1x2x32x128xf32>
    tpu.vector_store %arg4[%c0_16, %c0_17, %c0_18, %c0_19], %26 {strides = array<i32>} : memref<1x2x32x128xf32, #tpu.memory_space<vmem>>, vector<1x2x32x128xf32>,
    return
  }
  func.func @transform_0(%arg0: i32, %arg1: i32) -> (i32, i32, i32) {
    %c1_i32 = arith.constant 1 : i32
    %0 = arith.muli %arg0, %c1_i32 : i32
    %1 = arith.addi %0, %arg1 : i32
    %c0_i32 = arith.constant 0 : i32
    %c0_i32_0 = arith.constant 0 : i32
    %c0_i32_1 = arith.constant 0 : i32
    return %c0_i32, %1, %c0_i32_0 : i32, i32, i32
  }
  func.func @transform_1(%arg0: i32, %arg1: i32) -> (i32, i32, i32) {
    %c1_i32 = arith.constant 1 : i32
    %0 = arith.muli %arg0, %c1_i32 : i32
    %1 = arith.addi %0, %arg1 : i32
    %c0_i32 = arith.constant 0 : i32
    %c0_i32_0 = arith.constant 0 : i32
    %c0_i32_1 = arith.constant 0 : i32
    return %c0_i32, %1, %c0_i32_0 : i32, i32, i32
  }
  func.func @transform_2(%arg0: i32, %arg1: i32) -> (i32, i32, i32, i32) {
    %c0_i32 = arith.constant 0 : i32
    %c0_i32_0 = arith.constant 0 : i32
    %c0_i32_1 = arith.constant 0 : i32
    %c0_i32_2 = arith.constant 0 : i32
    return %arg0, %c0_i32, %c0_i32_0, %c0_i32_1 : i32, i32, i32, i32
  }
}

</mosaic_0001>

<llo_original>
// kernel: tpu_custom_call.1
$region0: #{tpu_custom_call.1}
  #allocation0 [shape = 'u32[]', space=smem, size = 0x4, offset = 0x4, fixed_abs, tag = 'smem constant byte address 0x4 - core index']
  #allocation1 [shape = 'u32[144,128]{1,0:T(1,128)}', space=vmem, size = 0x12000, scoped, tag = 'internal scratch']
  %s0 = inlined_call_operand.hbm [shape: f32[2,8,128], index: 0, kind: input, shape index: {}]
  %s1 = inlined_call_operand.hbm [shape: bf16[2,8,128], index: 1, kind: input, shape index: {}]
  %s2 = inlined_call_operand.hbm [shape: f32[1,2,32,128], index: 2, kind: output, shape index: {}]
  %s3 = sld [smem:[#allocation0]]
  $region30: #{tpu_custom_call.1} parent=0
    _
  %s5 = ssub.s32 1, %s3
  %s6 = scalar_select 0, %s5, %s3
  $region1: #{tpu_custom_call.1} parent=0
    #allocation2 [shape = 'u8[8192]{0}', space=vmem, size = 0x2000, scoped, tag = 'input window, operand 0, single buffered']
    #allocation3 [shape = 's32[1]{0}', space=sflag, size = 0x4, scoped, tag = 'scoped memory for tpu_custom_call.1']
    #allocation4 [shape = 's32[1]{0}', space=sflag, size = 0x4, scoped, tag = 'scoped memory for tpu_custom_call.1']
    #allocation5 [shape = 'u8[4096]{0}', space=vmem, size = 0x1000, scoped, tag = 'input window, operand 1, single buffered']
    #allocation6 [shape = 's32[1]{0}', space=sflag, size = 0x4, scoped, tag = 'scoped memory for tpu_custom_call.1']
    #allocation7 [shape = 'u8[32768]{0}', space=vmem, size = 0x8000, scoped, tag = 'output window, operand 0, single buffered']
    %7 = vsyncpa [#allocation3], 0
    %8 = vsyncpa [#allocation6], 0
    %9 = vsyncpa [#allocation4], 0
    // Predicated region
    $region2: #{tpu_custom_call.1} parent=1 // pred_check
      _
    $region3: #{tpu_custom_call.1} parent=1 // pred_check_branch
      %11 = sbr.rel (0) target = $region5
    $region4: #{tpu_custom_call.1} parent=1 // pred_region
      %s12 = sadd.s32 0, 0
      %s14 = ssub.s32 256, 256
      %15 = vsyncadd [#allocation3], %s14
      %s16 = smul.addr %s12, 128
      %s17 = scalar_lea.hbm %s0, %s16
      %s18 = sshll.u32 [#allocation2], 4
      %s19 = int_to_ptr.vmem [resolvable:$true] %s18
      %24 = dma.hbm_to_vmem [thread:$0]  %s17, 256, %s19, [#allocation3], 128, 128, 8
    $region5: #{tpu_custom_call.1} parent=1 // pred_fallthru
      _
    // Predicated region
    $region6: #{tpu_custom_call.1} parent=1 // pred_check
      _
    $region7: #{tpu_custom_call.1} parent=1 // pred_check_branch
      %26 = sbr.rel (0) target = $region9
    $region8: #{tpu_custom_call.1} parent=1 // pred_region
      %s27 = sadd.s32 0, 0
      %s29 = ssub.s32 128, 128
      %30 = vsyncadd [#allocation6], %s29
      %s31 = smul.addr %s27, 64
      %s32 = scalar_lea.hbm %s1, %s31
      %s33 = sshll.u32 [#allocation5], 4
      %s34 = int_to_ptr.vmem [resolvable:$true] %s33
      %39 = dma.hbm_to_vmem [thread:$0]  %s32, 128, %s34, [#allocation6], 64, 64, 4
    $region9: #{tpu_custom_call.1} parent=1 // pred_fallthru
      _
    // Predicated region
    $region10: #{tpu_custom_call.1} parent=1 // pred_check
      _
    $region11: #{tpu_custom_call.1} parent=1 // pred_check_branch
      %41 = sbr.rel (0) target = $region13
    $region12: #{tpu_custom_call.1} parent=1 // pred_region
      %42 = dma.done [#allocation3], 256
    $region13: #{tpu_custom_call.1} parent=1 // pred_fallthru
      _
    // Predicated region
    $region14: #{tpu_custom_call.1} parent=1 // pred_check
      _
    $region15: #{tpu_custom_call.1} parent=1 // pred_check_branch
      %44 = sbr.rel (0) target = $region17
    $region16: #{tpu_custom_call.1} parent=1 // pred_region
      %45 = dma.done [#allocation6], 128
    $region17: #{tpu_custom_call.1} parent=1 // pred_fallthru
      _
    %s46 = sadd.s32 0, 0
    %s47 = sadd.s32 0, 0
    %p48 = scmp.eq.s32.totalorder 0, 0
    // Predicated region
    $region18: #{tpu_custom_call.1} parent=1 // pred_check
      %p49 = pneg %p48
    $region19: #{tpu_custom_call.1} parent=1 // pred_check_branch
      %51 = sbr.rel (%p49) target = $region21
    $region20: #{tpu_custom_call.1} parent=1 // pred_region
      %52 = vst [vmem:[#allocation7] sm:$0xff] 0.0
      %53 = vst [vmem:[#allocation7 + $0x8] sm:$0xff] 0.0
      %54 = vst [vmem:[#allocation7 + $0x10] sm:$0xff] 0.0
      %55 = vst [vmem:[#allocation7 + $0x18] sm:$0xff] 0.0
      %56 = vst [vmem:[#allocation7 + $0x20] sm:$0xff] 0.0
      %57 = vst [vmem:[#allocation7 + $0x28] sm:$0xff] 0.0
      %58 = vst [vmem:[#allocation7 + $0x30] sm:$0xff] 0.0
      %59 = vst [vmem:[#allocation7 + $0x38] sm:$0xff] 0.0
    $region21: #{tpu_custom_call.1} parent=1 // pred_fallthru
      _
    %v60 = vld [vmem:[#allocation2] sm:$0xff]
    %v61 = vld [vmem:[#allocation2 + $0x8] sm:$0xff]
    %v62 = vmax.f32 %v60, 1e-05
    %v63 = vmax.f32 %v61, 1e-05
    %v64 = vmin.f32 %v62, 1.0
    %v65 = vmin.f32 %v63, 1.0
    %v66 = vld [vmem:[#allocation5] sm:$0xf]
    %v67 = vld [vmem:[#allocation5 + $0x4] sm:$0xf]
    %v68 = vunpack.c.l.bf16 %v66
    %v69 = vunpack.c.l.bf16 %v67
    %v70 = vmul.f32 %v64, %v68
    %v71 = vmul.f32 %v65, %v69
    %v72 = vadd.f32 %v70, 0.0
    %v73 = vadd.f32 %v71, 0.0
    %v74 = vadd.f32 %v64, 0.0
    %v75 = vadd.f32 %v65, 0.0
    %v76 = vadd.f32 %v68, 0.0
    %v77 = vadd.f32 %v69, 0.0
    %v78 = vsub.f32 1.0, %v64
    %v79 = vsub.f32 1.0, %v65
    %v80 = vmul.f32 %v78, %v78
    %v81 = vmul.f32 %v79, %v79
    %v82 = vmul.f32 %v68, %v80
    %v83 = vmul.f32 %v69, %v81
    %v84 = vlog2.pop %v64
    %v85 = vmul.f32 %v84, 0.6931472
    %v86 = vlog2.pop %v65
    %v87 = vmul.f32 %v86, 0.6931472
    %v88 = vmul.f32 %v82, %v85
    %v89 = vmul.f32 %v83, %v87
    %v90 = vadd.f32 %v88, 0.0
    %v91 = vadd.f32 %v89, 0.0
    %v92 = vld [vmem:[#allocation7] sm:$0xff]
    %v93 = vld [vmem:[#allocation7 + $0x8] sm:$0xff]
    %v94 = vld [vmem:[#allocation7 + $0x10] sm:$0xff]
    %v95 = vld [vmem:[#allocation7 + $0x18] sm:$0xff]
    %v96 = vld [vmem:[#allocation7 + $0x20] sm:$0xff]
    %v97 = vld [vmem:[#allocation7 + $0x28] sm:$0xff]
    %v98 = vld [vmem:[#allocation7 + $0x30] sm:$0xff]
    %v99 = vld [vmem:[#allocation7 + $0x38] sm:$0xff]
    %v100 = vadd.f32 %v92, %v72
    %v101 = vadd.f32 %v93, %v74
    %v102 = vadd.f32 %v94, %v76
    %v103 = vadd.f32 %v95, %v90
    %v104 = vadd.f32 %v96, %v73
    %v105 = vadd.f32 %v97, %v75
    %v106 = vadd.f32 %v98, %v77
    %v107 = vadd.f32 %v99, %v91
    %108 = vst [vmem:[#allocation7] sm:$0xff] %v100
    %109 = vst [vmem:[#allocation7 + $0x8] sm:$0xff] %v101
    %110 = vst [vmem:[#allocation7 + $0x10] sm:$0xff] %v102
    %111 = vst [vmem:[#allocation7 + $0x18] sm:$0xff] %v103
    %112 = vst [vmem:[#allocation7 + $0x20] sm:$0xff] %v104
    %113 = vst [vmem:[#allocation7 + $0x28] sm:$0xff] %v105
    %114 = vst [vmem:[#allocation7 + $0x30] sm:$0xff] %v106
    %115 = vst [vmem:[#allocation7 + $0x38] sm:$0xff] %v107
    // Predicated region
    $region22: #{tpu_custom_call.1} parent=1 // pred_check
      _
    $region23: #{tpu_custom_call.1} parent=1 // pred_check_branch
      %117 = sbr.rel (0) target = $region25
    $region24: #{tpu_custom_call.1} parent=1 // pred_region
      %s119 = ssub.s32 1024, 1024
      %120 = vsyncadd [#allocation4], %s119
      %s121 = sshll.u32 [#allocation7], 4
      %s122 = int_to_ptr.vmem [resolvable:$true] %s121
      %127 = dma.vmem_to_hbm [thread:$0]  %s122, 1024, %s2, [#allocation4], 128, 128, 8
    $region25: #{tpu_custom_call.1} parent=1 // pred_fallthru
      _
    // Predicated region
    $region26: #{tpu_custom_call.1} parent=1 // pred_check
      _
    $region27: #{tpu_custom_call.1} parent=1 // pred_check_branch
      %129 = sbr.rel (0) target = $region29
    $region28: #{tpu_custom_call.1} parent=1 // pred_region
      %130 = dma.done [#allocation4], 1024
    $region29: #{tpu_custom_call.1} parent=1 // pred_fallthru
      _
    %131 = vsyncpa [#allocation3], 1
    %132 = vsyncpa [#allocation6], 1
    %133 = vsyncpa [#allocation4], 1

</llo_original>
